<compile_context>
chip_gen: v7x
topology: tpu7x:2x2x1
jax: 0.10.0
libtpu: 0.0.40
codegen_flags: <defaults>
</compile_context>

<pallas_src>
import functools

import jax
import jax.numpy as jnp
from jax import lax
from jax.experimental import pallas as pl
from jax.experimental.pallas import tpu as pltpu
import numpy as np

LN_EPS = 1e-12
NBUF = 8  # in-flight word-row DMAs per slab


def _make_kernel(h_true, sv, nbuf):
    inv_h = 1.0 / float(h_true)

    def kernel(
        tok_ref,      # SMEM (R_pad,) int32      all token ids (scalar prefetch)
        seg_ref,      # VMEM (TS, 1) int32       segment ids for this row slab
        word_hbm,     # HBM  (V, H_pad) f32      word embedding table (never in VMEM)
        pos_ref,      # VMEM (TS, H_pad) f32     position rows for this slab
        segtab_ref,   # VMEM (SV, H_pad) f32     segment table
        gb_ref,       # VMEM (2, H_pad) f32      row 0 = gamma, row 1 = beta
        out_ref,      # VMEM (TS, H_pad)
        wbuf,         # VMEM (TS, H_pad) f32     gathered word rows (scratch)
        sem,          # DMA semaphores (nbuf,)
    ):
        ts, hp = out_ref.shape
        base = pl.program_id(0) * ts

        def issue(i):
            row = tok_ref[base + i]
            pltpu.make_async_copy(
                word_hbm.at[pl.ds(row, 1), :],
                wbuf.at[pl.ds(i, 1), :],
                sem.at[i % nbuf],
            ).start()

        # Prime the row-gather pipeline with `nbuf` DMAs in flight.
        for j in range(nbuf):
            issue(j)

        @pl.loop(0, ts)
        def _(i):
            # Wait for row i, then keep `nbuf` copies in flight.
            pltpu.make_async_copy(
                word_hbm.at[pl.ds(0, 1), :],
                wbuf.at[pl.ds(i, 1), :],
                sem.at[i % nbuf],
            ).wait()

            @pl.when(i + nbuf < ts)
            def _():
                issue(i + nbuf)

        # Segment embedding: cheap VPU select over the tiny segment table.
        seg = seg_ref[...]                                     # (ts, 1) int32
        seg_e = segtab_ref[pl.ds(0, 1), :]                     # (1, hp)
        for j in range(1, sv):
            seg_e = jnp.where(seg == j, segtab_ref[pl.ds(j, 1), :], seg_e)

        # Sum of the three embeddings (padded lanes are all zero).
        e = wbuf[...] + pos_ref[...] + seg_e                   # (ts, hp) f32

        # Fused one-pass LayerNorm statistics over the true hidden width.
        sum_e = jnp.sum(e, axis=-1, keepdims=True)             # (ts, 1)
        sum_e2 = jnp.sum(e * e, axis=-1, keepdims=True)        # (ts, 1)
        mean = sum_e * inv_h
        var = jnp.maximum(sum_e2 * inv_h - mean * mean, 0.0)
        y = (e - mean) * lax.rsqrt(var + LN_EPS)
        y = y * gb_ref[pl.ds(0, 1), :] + gb_ref[pl.ds(1, 1), :]

        # Dropout: identity in eval mode.
        out_ref[...] = y.astype(out_ref.dtype)

    return kernel


def _round_up(x, m):
    return ((x + m - 1) // m) * m


def _choose_row_tile(batch, s_pad):
    """Slab size (rows): multiple of 8, divides B*S_pad, targets >= 256 rows."""
    if s_pad >= 256:
        for ts in (512, 256, 128, 64, 32, 16, 8):
            if s_pad % ts == 0:
                return ts
        return 8  # unreachable (s_pad is a multiple of 8)
    # Short sequences: pack several full sequences per slab.
    k = max(1, 256 // s_pad)
    k = min(k, batch)
    while batch % k:
        k -= 1
    return k * s_pad


def bert_embeddings(token_ids, segment_ids, word_emb, pos_emb, seg_emb, gamma, beta,
                    out_dtype=jnp.float32):
    B, S = token_ids.shape
    V, H = word_emb.shape
    SV = seg_emb.shape[0]
    if segment_ids is None:
        segment_ids = jnp.zeros_like(token_ids)

    S_pad = _round_up(S, 8)
    H_pad = _round_up(H, 128)
    TS = _choose_row_tile(B, S_pad)
    R_pad = B * S_pad
    n_slabs = R_pad // TS
    pos_blocks = (S_pad // TS) if TS <= S_pad else 1

    # --- ids: pad sequence to S_pad, flatten rows ---------------------------
    pad_s = S_pad - S
    tok = jnp.pad(token_ids.astype(jnp.int32), ((0, 0), (0, pad_s)))
    seg = jnp.pad(segment_ids.astype(jnp.int32), ((0, 0), (0, pad_s)))
    tok_flat = tok.reshape(R_pad)           # scalar prefetch -> SMEM
    seg2d = seg.reshape(R_pad, 1)           # (TS,1) VMEM blocks drive the VPU select

    # --- tables: pad hidden dim to a lane-dense multiple of 128 -------------
    pad_h = H_pad - H
    word_p = jnp.pad(word_emb.astype(jnp.float32), ((0, 0), (0, pad_h)))      # stays in HBM
    pos_f = pos_emb.astype(jnp.float32)
    if pos_f.shape[0] < S_pad:
        pos_f = jnp.pad(pos_f, ((0, S_pad - pos_f.shape[0]), (0, 0)))
    pos_f = jnp.pad(pos_f[:S_pad], ((0, 0), (0, pad_h)))
    if TS > S_pad:                           # several sequences per slab
        pos_f = jnp.tile(pos_f, (TS // S_pad, 1))
    segtab_p = jnp.pad(seg_emb.astype(jnp.float32), ((0, 0), (0, pad_h)))
    gb = jnp.pad(jnp.stack([gamma, beta]).astype(jnp.float32), ((0, 0), (0, pad_h)))

    in_specs = [
        pl.BlockSpec((TS, 1), lambda g, tok: (g, 0)),                 # segment ids
        pl.BlockSpec(memory_space=pl.ANY),                            # word table (HBM)
        pl.BlockSpec((TS, H_pad), lambda g, tok: (g % pos_blocks, 0)),  # position rows
        pl.BlockSpec((SV, H_pad), lambda g, tok: (0, 0)),             # segment table
        pl.BlockSpec((2, H_pad), lambda g, tok: (0, 0)),              # gamma/beta
    ]
    out_spec = pl.BlockSpec((TS, H_pad), lambda g, tok: (g, 0))

    # Scoped-VMEM budget from the actual per-step working set (no tables in VMEM).
    blk = 4 * TS * H_pad
    vmem_bytes = (2 * blk                       # position block (double-buffered)
                  + 2 * blk                     # output block (double-buffered)
                  + blk                         # word-row gather scratch
                  + 2 * TS * 128 * 4            # segment-id blocks (lane-padded)
                  + 2 * 4 * (SV + 8) * H_pad    # segment table + gamma/beta
                  + (2 << 20))                  # headroom
    vmem_bytes = int(min(max(vmem_bytes, 4 << 20), 32 << 20))

    kernel = _make_kernel(H, SV, NBUF)
    out = pl.pallas_call(
        kernel,
        out_shape=jax.ShapeDtypeStruct((R_pad, H_pad), out_dtype),
        grid_spec=pltpu.PrefetchScalarGridSpec(
            num_scalar_prefetch=1,
            grid=(n_slabs,),
            in_specs=in_specs,
            out_specs=out_spec,
            scratch_shapes=[
                pltpu.VMEM((TS, H_pad), jnp.float32),
                pltpu.SemaphoreType.DMA((NBUF,)),
            ],
        ),
        compiler_params=pltpu.CompilerParams(
            dimension_semantics=("parallel",),
            vmem_limit_bytes=vmem_bytes,
        ),
    )(tok_flat, seg2d, word_p, pos_f, segtab_p, gb)

    return out.reshape(B, S_pad, H_pad)[:, :S, :H]


def reference(token_ids, segment_ids, word_emb, pos_emb, seg_emb, gamma, beta):
    S = token_ids.shape[1]
    pos_ids = jnp.arange(S, dtype=jnp.int32)[None, :]
    e = word_emb[token_ids] + pos_emb[pos_ids] + seg_emb[segment_ids]
    mean = jnp.mean(e, axis=-1, keepdims=True)
    var = jnp.mean((e - mean) ** 2, axis=-1, keepdims=True)
    return (e - mean) / jnp.sqrt(var + LN_EPS) * gamma + beta


if __name__ == "__main__":
    # Small synthetic config consistent with the module's __init__.
    vocab_size = 64
    hidden_size = 32
    max_position = 16
    segment_vocab_size = 2
    batch, seq = 2, 8

    key = jax.random.PRNGKey(0)
    k_w, k_p, k_s, k_g, k_b, k_tok, k_seg = jax.random.split(key, 7)

    # nn.Embedding default init: N(0, 1); padding_idx=2 row zeroed for words.
    word_emb = jax.random.normal(k_w, (vocab_size, hidden_size), jnp.float32)
    word_emb = word_emb.at[2].set(0.0)
    pos_emb = jax.random.normal(k_p, (max_position, hidden_size), jnp.float32)
    seg_emb = jax.random.normal(k_s, (segment_vocab_size, hidden_size), jnp.float32)
    # LayerNorm affine params (non-trivial values to exercise the broadcast path).
    gamma = 1.0 + 0.1 * jax.random.normal(k_g, (hidden_size,), jnp.float32)
    beta = 0.1 * jax.random.normal(k_b, (hidden_size,), jnp.float32)

    token_ids = jax.random.randint(k_tok, (batch, seq), 0, vocab_size, jnp.int32)
    segment_ids = jax.random.randint(k_seg, (batch, seq), 0, segment_vocab_size, jnp.int32)

    out = bert_embeddings(token_ids, segment_ids, word_emb, pos_emb, seg_emb, gamma, beta)
    out = jax.block_until_ready(out)

    ref = reference(token_ids, segment_ids, word_emb, pos_emb, seg_emb, gamma, beta)
    np.testing.assert_allclose(np.asarray(out), np.asarray(ref), rtol=1e-5, atol=1e-5)

    print("KERNEL_OK")
</pallas_src>

<mosaic_0001>
module attributes {stable_mosaic.version = 11 : i64} {
  func.func @kernel(%arg0: i32, %arg1: memref<16xi32, #tpu.memory_space<smem>>, %arg2: memref<16x1xi32, #tpu.memory_space<vmem>>, %arg3: memref<64x128xf32, #tpu.memory_space<any>>, %arg4: memref<16x128xf32, #tpu.memory_space<vmem>>, %arg5: memref<2x128xf32, #tpu.memory_space<vmem>>, %arg6: memref<2x128xf32, #tpu.memory_space<vmem>>, %arg7: memref<16x128xf32, #tpu.memory_space<vmem>>, %arg8: memref<16x128xf32, #tpu.memory_space<vmem>>, %arg9: memref<8x!tpu.dma_semaphore, #tpu.memory_space<semaphore_mem>>) attributes {dimension_semantics = [#tpu.dimension_semantics<parallel>], iteration_bounds = array<i64: 1>, scalar_prefetch = 1 : i64, scratch_operands = 2 : i64, tpu.core_type = #tpu.core_type<tc>, window_params = [{transform_indices = @transform_0, window_bounds = array<i64: 16, 1>}, {}, {transform_indices = @transform_2, window_bounds = array<i64: 16, 128>}, {pipeline_mode = #tpu.pipeline_mode<synchronous>, transform_indices = @transform_3, window_bounds = array<i64: 2, 128>}, {pipeline_mode = #tpu.pipeline_mode<synchronous>, transform_indices = @transform_4, window_bounds = array<i64: 2, 128>}, {transform_indices = @transform_5, window_bounds = array<i64: 16, 128>}]} {
    %c16_i32 = arith.constant 16 : i32
    %0 = arith.muli %arg0, %c16_i32 : i32
    %c0_i32 = arith.constant 0 : i32
    %1 = arith.addi %0, %c0_i32 : i32
    %2 = arith.index_cast %1 : i32 to index
    %3 = memref.load %arg1[%2] : memref<16xi32, #tpu.memory_space<smem>>
    %c0_i32_0 = arith.constant 0 : i32
    %c0_i32_1 = arith.constant 0 : i32
    %4 = tpu.memref_slice %arg3[%3, %c0_i32_1] : memref<64x128xf32, #tpu.memory_space<any>> -> memref<1x128xf32, #tpu.memory_space<any>>
    %c0_i32_2 = arith.constant 0 : i32
    %c0_i32_3 = arith.constant 0 : i32
    %5 = tpu.memref_slice %arg8[%c0_i32_2, %c0_i32_3] : memref<16x128xf32, #tpu.memory_space<vmem>> -> memref<1x128xf32, #tpu.memory_space<vmem>>
    %6 = tpu.memref_slice %arg9[%c0_i32_0] : memref<8x!tpu.dma_semaphore, #tpu.memory_space<semaphore_mem>> -> memref<1x!tpu.dma_semaphore, #tpu.memory_space<semaphore_mem>>
    %7 = tpu.memref_squeeze %6 : memref<1x!tpu.dma_semaphore, #tpu.memory_space<semaphore_mem>> -> memref<!tpu.dma_semaphore, #tpu.memory_space<semaphore_mem>>
    tpu.enqueue_dma source(%4 : memref<1x128xf32, #tpu.memory_space<any>>) target(%5 : memref<1x128xf32, #tpu.memory_space<vmem>>) target_semaphore(%7 : memref<!tpu.dma_semaphore, #tpu.memory_space<semaphore_mem>>)
    %c1_i32 = arith.constant 1 : i32
    %8 = arith.addi %0, %c1_i32 : i32
    %9 = arith.index_cast %8 : i32 to index
    %10 = memref.load %arg1[%9] : memref<16xi32, #tpu.memory_space<smem>>
    %c1_i32_4 = arith.constant 1 : i32
    %c0_i32_5 = arith.constant 0 : i32
    %11 = tpu.memref_slice %arg3[%10, %c0_i32_5] : memref<64x128xf32, #tpu.memory_space<any>> -> memref<1x128xf32, #tpu.memory_space<any>>
    %c1_i32_6 = arith.constant 1 : i32
    %c0_i32_7 = arith.constant 0 : i32
    %12 = tpu.memref_slice %arg8[%c1_i32_6, %c0_i32_7] : memref<16x128xf32, #tpu.memory_space<vmem>> -> memref<1x128xf32, #tpu.memory_space<vmem>>
    %13 = tpu.memref_slice %arg9[%c1_i32_4] : memref<8x!tpu.dma_semaphore, #tpu.memory_space<semaphore_mem>> -> memref<1x!tpu.dma_semaphore, #tpu.memory_space<semaphore_mem>>
    %14 = tpu.memref_squeeze %13 : memref<1x!tpu.dma_semaphore, #tpu.memory_space<semaphore_mem>> -> memref<!tpu.dma_semaphore, #tpu.memory_space<semaphore_mem>>
    tpu.enqueue_dma source(%11 : memref<1x128xf32, #tpu.memory_space<any>>) target(%12 : memref<1x128xf32, #tpu.memory_space<vmem>>) target_semaphore(%14 : memref<!tpu.dma_semaphore, #tpu.memory_space<semaphore_mem>>)
    %c2_i32 = arith.constant 2 : i32
    %15 = arith.addi %0, %c2_i32 : i32
    %16 = arith.index_cast %15 : i32 to index
    %17 = memref.load %arg1[%16] : memref<16xi32, #tpu.memory_space<smem>>
    %c2_i32_8 = arith.constant 2 : i32
    %c0_i32_9 = arith.constant 0 : i32
    %18 = tpu.memref_slice %arg3[%17, %c0_i32_9] : memref<64x128xf32, #tpu.memory_space<any>> -> memref<1x128xf32, #tpu.memory_space<any>>
    %c2_i32_10 = arith.constant 2 : i32
    %c0_i32_11 = arith.constant 0 : i32
    %19 = tpu.memref_slice %arg8[%c2_i32_10, %c0_i32_11] : memref<16x128xf32, #tpu.memory_space<vmem>> -> memref<1x128xf32, #tpu.memory_space<vmem>>
    %20 = tpu.memref_slice %arg9[%c2_i32_8] : memref<8x!tpu.dma_semaphore, #tpu.memory_space<semaphore_mem>> -> memref<1x!tpu.dma_semaphore, #tpu.memory_space<semaphore_mem>>
    %21 = tpu.memref_squeeze %20 : memref<1x!tpu.dma_semaphore, #tpu.memory_space<semaphore_mem>> -> memref<!tpu.dma_semaphore, #tpu.memory_space<semaphore_mem>>
    tpu.enqueue_dma source(%18 : memref<1x128xf32, #tpu.memory_space<any>>) target(%19 : memref<1x128xf32, #tpu.memory_space<vmem>>) target_semaphore(%21 : memref<!tpu.dma_semaphore, #tpu.memory_space<semaphore_mem>>)
    %c3_i32 = arith.constant 3 : i32
    %22 = arith.addi %0, %c3_i32 : i32
    %23 = arith.index_cast %22 : i32 to index
    %24 = memref.load %arg1[%23] : memref<16xi32, #tpu.memory_space<smem>>
    %c3_i32_12 = arith.constant 3 : i32
    %c0_i32_13 = arith.constant 0 : i32
    %25 = tpu.memref_slice %arg3[%24, %c0_i32_13] : memref<64x128xf32, #tpu.memory_space<any>> -> memref<1x128xf32, #tpu.memory_space<any>>
    %c3_i32_14 = arith.constant 3 : i32
    %c0_i32_15 = arith.constant 0 : i32
    %26 = tpu.memref_slice %arg8[%c3_i32_14, %c0_i32_15] : memref<16x128xf32, #tpu.memory_space<vmem>> -> memref<1x128xf32, #tpu.memory_space<vmem>>
    %27 = tpu.memref_slice %arg9[%c3_i32_12] : memref<8x!tpu.dma_semaphore, #tpu.memory_space<semaphore_mem>> -> memref<1x!tpu.dma_semaphore, #tpu.memory_space<semaphore_mem>>
    %28 = tpu.memref_squeeze %27 : memref<1x!tpu.dma_semaphore, #tpu.memory_space<semaphore_mem>> -> memref<!tpu.dma_semaphore, #tpu.memory_space<semaphore_mem>>
    tpu.enqueue_dma source(%25 : memref<1x128xf32, #tpu.memory_space<any>>) target(%26 : memref<1x128xf32, #tpu.memory_space<vmem>>) target_semaphore(%28 : memref<!tpu.dma_semaphore, #tpu.memory_space<semaphore_mem>>)
    %c4_i32 = arith.constant 4 : i32
    %29 = arith.addi %0, %c4_i32 : i32
    %30 = arith.index_cast %29 : i32 to index
    %31 = memref.load %arg1[%30] : memref<16xi32, #tpu.memory_space<smem>>
    %c4_i32_16 = arith.constant 4 : i32
    %c0_i32_17 = arith.constant 0 : i32
    %32 = tpu.memref_slice %arg3[%31, %c0_i32_17] : memref<64x128xf32, #tpu.memory_space<any>> -> memref<1x128xf32, #tpu.memory_space<any>>
    %c4_i32_18 = arith.constant 4 : i32
    %c0_i32_19 = arith.constant 0 : i32
    %33 = tpu.memref_slice %arg8[%c4_i32_18, %c0_i32_19] : memref<16x128xf32, #tpu.memory_space<vmem>> -> memref<1x128xf32, #tpu.memory_space<vmem>>
    %34 = tpu.memref_slice %arg9[%c4_i32_16] : memref<8x!tpu.dma_semaphore, #tpu.memory_space<semaphore_mem>> -> memref<1x!tpu.dma_semaphore, #tpu.memory_space<semaphore_mem>>
    %35 = tpu.memref_squeeze %34 : memref<1x!tpu.dma_semaphore, #tpu.memory_space<semaphore_mem>> -> memref<!tpu.dma_semaphore, #tpu.memory_space<semaphore_mem>>
    tpu.enqueue_dma source(%32 : memref<1x128xf32, #tpu.memory_space<any>>) target(%33 : memref<1x128xf32, #tpu.memory_space<vmem>>) target_semaphore(%35 : memref<!tpu.dma_semaphore, #tpu.memory_space<semaphore_mem>>)
    %c5_i32 = arith.constant 5 : i32
    %36 = arith.addi %0, %c5_i32 : i32
    %37 = arith.index_cast %36 : i32 to index
    %38 = memref.load %arg1[%37] : memref<16xi32, #tpu.memory_space<smem>>
    %c5_i32_20 = arith.constant 5 : i32
    %c0_i32_21 = arith.constant 0 : i32
    %39 = tpu.memref_slice %arg3[%38, %c0_i32_21] : memref<64x128xf32, #tpu.memory_space<any>> -> memref<1x128xf32, #tpu.memory_space<any>>
    %c5_i32_22 = arith.constant 5 : i32
    %c0_i32_23 = arith.constant 0 : i32
    %40 = tpu.memref_slice %arg8[%c5_i32_22, %c0_i32_23] : memref<16x128xf32, #tpu.memory_space<vmem>> -> memref<1x128xf32, #tpu.memory_space<vmem>>
    %41 = tpu.memref_slice %arg9[%c5_i32_20] : memref<8x!tpu.dma_semaphore, #tpu.memory_space<semaphore_mem>> -> memref<1x!tpu.dma_semaphore, #tpu.memory_space<semaphore_mem>>
    %42 = tpu.memref_squeeze %41 : memref<1x!tpu.dma_semaphore, #tpu.memory_space<semaphore_mem>> -> memref<!tpu.dma_semaphore, #tpu.memory_space<semaphore_mem>>
    tpu.enqueue_dma source(%39 : memref<1x128xf32, #tpu.memory_space<any>>) target(%40 : memref<1x128xf32, #tpu.memory_space<vmem>>) target_semaphore(%42 : memref<!tpu.dma_semaphore, #tpu.memory_space<semaphore_mem>>)
    %c6_i32 = arith.constant 6 : i32
    %43 = arith.addi %0, %c6_i32 : i32
    %44 = arith.index_cast %43 : i32 to index
    %45 = memref.load %arg1[%44] : memref<16xi32, #tpu.memory_space<smem>>
    %c6_i32_24 = arith.constant 6 : i32
    %c0_i32_25 = arith.constant 0 : i32
    %46 = tpu.memref_slice %arg3[%45, %c0_i32_25] : memref<64x128xf32, #tpu.memory_space<any>> -> memref<1x128xf32, #tpu.memory_space<any>>
    %c6_i32_26 = arith.constant 6 : i32
    %c0_i32_27 = arith.constant 0 : i32
    %47 = tpu.memref_slice %arg8[%c6_i32_26, %c0_i32_27] : memref<16x128xf32, #tpu.memory_space<vmem>> -> memref<1x128xf32, #tpu.memory_space<vmem>>
    %48 = tpu.memref_slice %arg9[%c6_i32_24] : memref<8x!tpu.dma_semaphore, #tpu.memory_space<semaphore_mem>> -> memref<1x!tpu.dma_semaphore, #tpu.memory_space<semaphore_mem>>
    %49 = tpu.memref_squeeze %48 : memref<1x!tpu.dma_semaphore, #tpu.memory_space<semaphore_mem>> -> memref<!tpu.dma_semaphore, #tpu.memory_space<semaphore_mem>>
    tpu.enqueue_dma source(%46 : memref<1x128xf32, #tpu.memory_space<any>>) target(%47 : memref<1x128xf32, #tpu.memory_space<vmem>>) target_semaphore(%49 : memref<!tpu.dma_semaphore, #tpu.memory_space<semaphore_mem>>)
    %c7_i32 = arith.constant 7 : i32
    %50 = arith.addi %0, %c7_i32 : i32
    %51 = arith.index_cast %50 : i32 to index
    %52 = memref.load %arg1[%51] : memref<16xi32, #tpu.memory_space<smem>>
    %c7_i32_28 = arith.constant 7 : i32
    %c0_i32_29 = arith.constant 0 : i32
    %53 = tpu.memref_slice %arg3[%52, %c0_i32_29] : memref<64x128xf32, #tpu.memory_space<any>> -> memref<1x128xf32, #tpu.memory_space<any>>
    %c7_i32_30 = arith.constant 7 : i32
    %c0_i32_31 = arith.constant 0 : i32
    %54 = tpu.memref_slice %arg8[%c7_i32_30, %c0_i32_31] : memref<16x128xf32, #tpu.memory_space<vmem>> -> memref<1x128xf32, #tpu.memory_space<vmem>>
    %55 = tpu.memref_slice %arg9[%c7_i32_28] : memref<8x!tpu.dma_semaphore, #tpu.memory_space<semaphore_mem>> -> memref<1x!tpu.dma_semaphore, #tpu.memory_space<semaphore_mem>>
    %56 = tpu.memref_squeeze %55 : memref<1x!tpu.dma_semaphore, #tpu.memory_space<semaphore_mem>> -> memref<!tpu.dma_semaphore, #tpu.memory_space<semaphore_mem>>
    tpu.enqueue_dma source(%53 : memref<1x128xf32, #tpu.memory_space<any>>) target(%54 : memref<1x128xf32, #tpu.memory_space<vmem>>) target_semaphore(%56 : memref<!tpu.dma_semaphore, #tpu.memory_space<semaphore_mem>>)
    %c0_i32_32 = arith.constant 0 : i32
    %c16_i32_33 = arith.constant 16 : i32
    %57 = arith.addi %c0_i32_32, %c16_i32_33 : i32
    %c1_i32_34 = arith.constant 1 : i32
    scf.for %arg10 = %c0_i32_32 to %57 step %c1_i32_34  : i32 {
      %c1_i32_56 = arith.constant 1 : i32
      %101 = arith.muli %arg10, %c1_i32_56 : i32
      %c0_i32_57 = arith.constant 0 : i32
      %102 = arith.addi %c0_i32_57, %101 : i32
      %c8_i32 = arith.constant 8 : i32
      %c0_i32_58 = arith.constant 0 : i32
      %103 = arith.cmpi eq, %c8_i32, %c0_i32_58 : i32
      %c1_i32_59 = arith.constant 1 : i32
      %104 = arith.select %103, %c1_i32_59, %c8_i32 : i32
      %105 = arith.remsi %102, %104 : i32
      %c0_i32_60 = arith.constant 0 : i32
      %106 = arith.cmpi ne, %105, %c0_i32_60 : i32
      %c0_i32_61 = arith.constant 0 : i32
      %107 = arith.cmpi slt, %105, %c0_i32_61 : i32
      %c0_i32_62 = arith.constant 0 : i32
      %108 = arith.cmpi slt, %104, %c0_i32_62 : i32
      %109 = arith.xori %107, %108 : i1
      %110 = arith.andi %109, %106 : i1
      %111 = arith.addi %105, %104 : i32
      %112 = arith.select %110, %111, %105 : i32
      %c0_i32_63 = arith.constant 0 : i32
      %c0_i32_64 = arith.constant 0 : i32
      %113 = tpu.memref_slice %arg3[%c0_i32_63, %c0_i32_64] : memref<64x128xf32, #tpu.memory_space<any>> -> memref<1x128xf32, #tpu.memory_space<any>>
      %c0_i32_65 = arith.constant 0 : i32
      %114 = tpu.memref_slice %arg8[%102, %c0_i32_65] : memref<16x128xf32, #tpu.memory_space<vmem>> -> memref<1x128xf32, #tpu.memory_space<vmem>>
      %115 = tpu.memref_slice %arg9[%112] : memref<8x!tpu.dma_semaphore, #tpu.memory_space<semaphore_mem>> -> memref<1x!tpu.dma_semaphore, #tpu.memory_space<semaphore_mem>>
      %116 = tpu.memref_squeeze %115 : memref<1x!tpu.dma_semaphore, #tpu.memory_space<semaphore_mem>> -> memref<!tpu.dma_semaphore, #tpu.memory_space<semaphore_mem>>
      tpu.wait_dma2 semaphore(%116 : memref<!tpu.dma_semaphore, #tpu.memory_space<semaphore_mem>>) src(%113 : memref<1x128xf32, #tpu.memory_space<any>>) dst(%114 : memref<1x128xf32, #tpu.memory_space<vmem>>)
      %c8_i32_66 = arith.constant 8 : i32
      %117 = arith.addi %102, %c8_i32_66 : i32
      %c16_i32_67 = arith.constant 16 : i32
      %118 = arith.cmpi slt, %117, %c16_i32_67 : i32
      %119 = arith.extui %118 : i1 to i32
      %c0_i32_68 = arith.constant 0 : i32
      %120 = arith.cmpi ne, %119, %c0_i32_68 : i32
      scf.if %120 {
        %c8_i32_69 = arith.constant 8 : i32
        %121 = arith.addi %102, %c8_i32_69 : i32
        %122 = arith.addi %0, %121 : i32
        %123 = arith.index_cast %122 : i32 to index
        %124 = memref.load %arg1[%123] : memref<16xi32, #tpu.memory_space<smem>>
        %c8_i32_70 = arith.constant 8 : i32
        %c0_i32_71 = arith.constant 0 : i32
        %125 = arith.cmpi eq, %c8_i32_70, %c0_i32_71 : i32
        %c1_i32_72 = arith.constant 1 : i32
        %126 = arith.select %125, %c1_i32_72, %c8_i32_70 : i32
        %127 = arith.remsi %121, %126 : i32
        %c0_i32_73 = arith.constant 0 : i32
        %128 = arith.cmpi ne, %127, %c0_i32_73 : i32
        %c0_i32_74 = arith.constant 0 : i32
        %129 = arith.cmpi slt, %127, %c0_i32_74 : i32
        %c0_i32_75 = arith.constant 0 : i32
        %130 = arith.cmpi slt, %126, %c0_i32_75 : i32
        %131 = arith.xori %129, %130 : i1
        %132 = arith.andi %131, %128 : i1
        %133 = arith.addi %127, %126 : i32
        %134 = arith.select %132, %133, %127 : i32
        %c0_i32_76 = arith.constant 0 : i32
        %135 = tpu.memref_slice %arg3[%124, %c0_i32_76] : memref<64x128xf32, #tpu.memory_space<any>> -> memref<1x128xf32, #tpu.memory_space<any>>
        %c0_i32_77 = arith.constant 0 : i32
        %136 = tpu.memref_slice %arg8[%121, %c0_i32_77] : memref<16x128xf32, #tpu.memory_space<vmem>> -> memref<1x128xf32, #tpu.memory_space<vmem>>
        %137 = tpu.memref_slice %arg9[%134] : memref<8x!tpu.dma_semaphore, #tpu.memory_space<semaphore_mem>> -> memref<1x!tpu.dma_semaphore, #tpu.memory_space<semaphore_mem>>
        %138 = tpu.memref_squeeze %137 : memref<1x!tpu.dma_semaphore, #tpu.memory_space<semaphore_mem>> -> memref<!tpu.dma_semaphore, #tpu.memory_space<semaphore_mem>>
        tpu.enqueue_dma source(%135 : memref<1x128xf32, #tpu.memory_space<any>>) target(%136 : memref<1x128xf32, #tpu.memory_space<vmem>>) target_semaphore(%138 : memref<!tpu.dma_semaphore, #tpu.memory_space<semaphore_mem>>)
      } else {
      }
    }
    %c16_i32_35 = arith.constant 16 : i32
    %c0 = arith.constant 0 : index
    %c0_36 = arith.constant 0 : index
    %58 = vector.load %arg2[%c0, %c0_36] : memref<16x1xi32, #tpu.memory_space<vmem>>, vector<16x1xi32>
    %c0_37 = arith.constant 0 : index
    %c0_38 = arith.constant 0 : index
    %59 = vector.load %arg5[%c0_37, %c0_38] : memref<2x128xf32, #tpu.memory_space<vmem>>, vector<1x128xf32>
    %c1_i32_39 = arith.constant 1 : i32
    %60 = vector.broadcast %c1_i32_39 : i32 to vector<16x1xi32>
    %61 = arith.cmpi eq, %58, %60 : vector<16x1xi32>
    %c1 = arith.constant 1 : index
    %c0_40 = arith.constant 0 : index
    %62 = vector.load %arg5[%c1, %c0_40] : memref<2x128xf32, #tpu.memory_space<vmem>>, vector<1x128xf32>
    %63 = vector.shape_cast %61 : vector<16x1xi1> to vector<16x1xi1>
    %64 = vector.broadcast %63 : vector<16x1xi1> to vector<16x128xi1>
    %65 = vector.shape_cast %62 : vector<1x128xf32> to vector<1x128xf32>
    %66 = vector.broadcast %65 : vector<1x128xf32> to vector<16x128xf32>
    %67 = vector.shape_cast %59 : vector<1x128xf32> to vector<1x128xf32>
    %68 = vector.broadcast %67 : vector<1x128xf32> to vector<16x128xf32>
    %69 = arith.select %64, %66, %68 : vector<16x128xi1>, vector<16x128xf32>
    %c0_41 = arith.constant 0 : index
    %c0_42 = arith.constant 0 : index
    %70 = vector.load %arg8[%c0_41, %c0_42] : memref<16x128xf32, #tpu.memory_space<vmem>>, vector<16x128xf32>
    %c0_43 = arith.constant 0 : index
    %c0_44 = arith.constant 0 : index
    %71 = vector.load %arg4[%c0_43, %c0_44] : memref<16x128xf32, #tpu.memory_space<vmem>>, vector<16x128xf32>
    %72 = arith.addf %70, %71 : vector<16x128xf32>
    %73 = arith.addf %72, %69 : vector<16x128xf32>
    %cst = arith.constant dense<0.000000e+00> : vector<16xf32>
    %74 = vector.multi_reduction <add>, %73, %cst [1] : vector<16x128xf32> to vector<16xf32>
    %75 = vector.shape_cast %74 : vector<16xf32> to vector<16x1xf32>
    %76 = arith.mulf %73, %73 : vector<16x128xf32>
    %cst_45 = arith.constant dense<0.000000e+00> : vector<16xf32>
    %77 = vector.multi_reduction <add>, %76, %cst_45 [1] : vector<16x128xf32> to vector<16xf32>
    %78 = vector.shape_cast %77 : vector<16xf32> to vector<16x1xf32>
    %cst_46 = arith.constant 3.125000e-02 : f32
    %79 = vector.broadcast %cst_46 : f32 to vector<16x1xf32>
    %80 = arith.mulf %75, %79 : vector<16x1xf32>
    %cst_47 = arith.constant 3.125000e-02 : f32
    %81 = vector.broadcast %cst_47 : f32 to vector<16x1xf32>
    %82 = arith.mulf %78, %81 : vector<16x1xf32>
    %83 = arith.mulf %80, %80 : vector<16x1xf32>
    %84 = arith.subf %82, %83 : vector<16x1xf32>
    %cst_48 = arith.constant 0.000000e+00 : f32
    %85 = vector.broadcast %cst_48 : f32 to vector<16x1xf32>
    %86 = arith.maximumf %84, %85 : vector<16x1xf32>
    %87 = vector.broadcast %80 : vector<16x1xf32> to vector<16x128xf32>
    %88 = arith.subf %73, %87 : vector<16x128xf32>
    %cst_49 = arith.constant 9.99999996E-13 : f32
    %89 = vector.broadcast %cst_49 : f32 to vector<16x1xf32>
    %90 = arith.addf %86, %89 : vector<16x1xf32>
    %91 = math.rsqrt %90 : vector<16x1xf32>
    %92 = vector.broadcast %91 : vector<16x1xf32> to vector<16x128xf32>
    %93 = arith.mulf %88, %92 : vector<16x128xf32>
    %c0_50 = arith.constant 0 : index
    %c0_51 = arith.constant 0 : index
    %94 = vector.load %arg6[%c0_50, %c0_51] : memref<2x128xf32, #tpu.memory_space<vmem>>, vector<1x128xf32>
    %95 = vector.broadcast %94 : vector<1x128xf32> to vector<16x128xf32>
    %96 = arith.mulf %93, %95 : vector<16x128xf32>
    %c1_52 = arith.constant 1 : index
    %c0_53 = arith.constant 0 : index
    %97 = vector.load %arg6[%c1_52, %c0_53] : memref<2x128xf32, #tpu.memory_space<vmem>>, vector<1x128xf32>
    %98 = vector.broadcast %97 : vector<1x128xf32> to vector<16x128xf32>
    %99 = arith.addf %96, %98 : vector<16x128xf32>
    %c0_54 = arith.constant 0 : index
    %c0_55 = arith.constant 0 : index
    %100 = vector.load %arg7[%c0_54, %c0_55] : memref<16x128xf32, #tpu.memory_space<vmem>>, vector<16x128xf32>
    tpu.vector_store %arg7[%c0_54, %c0_55], %99 {strides = array<i32>} : memref<16x128xf32, #tpu.memory_space<vmem>>, vector<16x128xf32>,
    return
  }
  func.func @transform_0(%arg0: i32, %arg1: memref<16xi32, #tpu.memory_space<smem>>) -> (i32, i32) {
    %c0_i32 = arith.constant 0 : i32
    %c0_i32_0 = arith.constant 0 : i32
    return %arg0, %c0_i32 : i32, i32
  }
  func.func @transform_2(%arg0: i32, %arg1: memref<16xi32, #tpu.memory_space<smem>>) -> (i32, i32) {
    %c1_i32 = arith.constant 1 : i32
    %c0_i32 = arith.constant 0 : i32
    %0 = arith.cmpi eq, %c1_i32, %c0_i32 : i32
    %c1_i32_0 = arith.constant 1 : i32
    %1 = arith.select %0, %c1_i32_0, %c1_i32 : i32
    %2 = arith.remsi %arg0, %1 : i32
    %c0_i32_1 = arith.constant 0 : i32
    %3 = arith.cmpi ne, %2, %c0_i32_1 : i32
    %c0_i32_2 = arith.constant 0 : i32
    %4 = arith.cmpi slt, %2, %c0_i32_2 : i32
    %c0_i32_3 = arith.constant 0 : i32
    %5 = arith.cmpi slt, %1, %c0_i32_3 : i32
    %6 = arith.xori %4, %5 : i1
    %7 = arith.andi %6, %3 : i1
    %8 = arith.addi %2, %1 : i32
    %9 = arith.select %7, %8, %2 : i32
    %c0_i32_4 = arith.constant 0 : i32
    %c0_i32_5 = arith.constant 0 : i32
    return %9, %c0_i32_4 : i32, i32
  }
  func.func @transform_3(%arg0: i32, %arg1: memref<16xi32, #tpu.memory_space<smem>>) -> (i32, i32) {
    %c0_i32 = arith.constant 0 : i32
    %c0_i32_0 = arith.constant 0 : i32
    %c0_i32_1 = arith.constant 0 : i32
    return %c0_i32, %c0_i32_0 : i32, i32
  }
  func.func @transform_4(%arg0: i32, %arg1: memref<16xi32, #tpu.memory_space<smem>>) -> (i32, i32) {
    %c0_i32 = arith.constant 0 : i32
    %c0_i32_0 = arith.constant 0 : i32
    %c0_i32_1 = arith.constant 0 : i32
    return %c0_i32, %c0_i32_0 : i32, i32
  }
  func.func @transform_5(%arg0: i32, %arg1: memref<16xi32, #tpu.memory_space<smem>>) -> (i32, i32) {
    %c0_i32 = arith.constant 0 : i32
    %c0_i32_0 = arith.constant 0 : i32
    return %arg0, %c0_i32 : i32, i32
  }
}

</mosaic_0001>

<llo_original>
// kernel: tpu_custom_call.1
$region0: #{tpu_custom_call.1}
  #allocation0 [shape = 'u32[]', space=smem, size = 0x4, offset = 0x4, fixed_abs, tag = 'smem constant byte address 0x4 - core index']
  #allocation1 [shape = 'u32[144,128]{1,0:T(1,128)}', space=vmem, size = 0x12000, scoped, tag = 'internal scratch']
  #allocation2 [shape = 'f32[16,128]{1,0:T(8,128)}', space=vmem, size = 0x2000, scoped, tag = 'scratch operand']
  #allocation3 [shape = 's32[8]{0}', space=sflag, size = 0x20, scoped, tag = 'scratch operand']
  #allocation4 [shape = 's32[1]{0}', space=sflag, size = 0x4, scoped, tag = 'scoped memory for tpu_custom_call.1']
  #allocation5 [shape = 'u8[512]{0}', space=smem, size = 0x200, scoped, tag = 'prefetched SMEM operand 0']
  #allocation8 [shape = 's32[]', space=sflag, size = 0x4, offset = 0, fixed_abs, tag = 'sflag constant byte address 0x0 - dummy sync flag']
  #allocation9 [shape = 's32[]', space=sflag, size = 0x4, offset = 0, fixed_abs, tag = 'sflag constant byte address 0x0 - dummy sync flag']
  #allocation10 [shape = 'u32[]', space=smem, size = 0x4, offset = 0x44, fixed_abs, tag = 'smem constant byte address 0x44 - assertion arg 0']
  #allocation11 [shape = 'u32[]', space=smem, size = 0x4, offset = 0x48, fixed_abs, tag = 'smem constant byte address 0x48 - assertion arg 1']
  #allocation12 [shape = 's32[]', space=sflag, size = 0x4, offset = 0, fixed_abs, tag = 'sflag constant byte address 0x0 - dummy sync flag']
  #allocation13 [shape = 's32[]', space=sflag, size = 0x4, offset = 0, fixed_abs, tag = 'sflag constant byte address 0x0 - dummy sync flag']
  #allocation14 [shape = 's32[]', space=sflag, size = 0x4, offset = 0, fixed_abs, tag = 'sflag constant byte address 0x0 - dummy sync flag']
  #allocation15 [shape = 's32[]', space=sflag, size = 0x4, offset = 0, fixed_abs, tag = 'sflag constant byte address 0x0 - dummy sync flag']
  #allocation16 [shape = 's32[]', space=sflag, size = 0x4, offset = 0, fixed_abs, tag = 'sflag constant byte address 0x0 - dummy sync flag']
  #allocation17 [shape = 's32[]', space=sflag, size = 0x4, offset = 0, fixed_abs, tag = 'sflag constant byte address 0x0 - dummy sync flag']
  #allocation18 [shape = 's32[]', space=sflag, size = 0x4, offset = 0, fixed_abs, tag = 'sflag constant byte address 0x0 - dummy sync flag']
  #allocation19 [shape = 's32[]', space=sflag, size = 0x4, offset = 0, fixed_abs, tag = 'sflag constant byte address 0x0 - dummy sync flag']
  #allocation20 [shape = 's32[]', space=sflag, size = 0x4, offset = 0, fixed_abs, tag = 'sflag constant byte address 0x0 - dummy sync flag']
  #allocation21 [shape = 's32[]', space=sflag, size = 0x4, offset = 0, fixed_abs, tag = 'sflag constant byte address 0x0 - dummy sync flag']
  #allocation22 [shape = 's32[]', space=sflag, size = 0x4, offset = 0, fixed_abs, tag = 'sflag constant byte address 0x0 - dummy sync flag']
  #allocation23 [shape = 's32[]', space=sflag, size = 0x4, offset = 0, fixed_abs, tag = 'sflag constant byte address 0x0 - dummy sync flag']
  #allocation24 [shape = 's32[]', space=sflag, size = 0x4, offset = 0, fixed_abs, tag = 'sflag constant byte address 0x0 - dummy sync flag']
  #allocation25 [shape = 's32[]', space=sflag, size = 0x4, offset = 0, fixed_abs, tag = 'sflag constant byte address 0x0 - dummy sync flag']
  #allocation26 [shape = 's32[]', space=sflag, size = 0x4, offset = 0, fixed_abs, tag = 'sflag constant byte address 0x0 - dummy sync flag']
  #allocation27 [shape = 's32[]', space=sflag, size = 0x4, offset = 0, fixed_abs, tag = 'sflag constant byte address 0x0 - dummy sync flag']
  %s0 = inlined_call_operand.vmem [shape: s32[16], index: 0, kind: input, shape index: {}]
  %s1 = inlined_call_operand.vmem [shape: s32[16,1], index: 1, kind: input, shape index: {}]
  %s2 = inlined_call_operand.hbm [shape: f32[64,128], index: 2, kind: input, shape index: {}]
  %s3 = inlined_call_operand.vmem [shape: f32[16,128], index: 3, kind: input, shape index: {}]
  %s4 = inlined_call_operand.vmem [shape: f32[2,128], index: 4, kind: input, shape index: {}]
  %s5 = inlined_call_operand.vmem [shape: f32[2,128], index: 5, kind: input, shape index: {}]
  %s6 = inlined_call_operand.hbm [shape: f32[16,128], index: 6, kind: output, shape index: {}]
  %s7 = sld [smem:[#allocation0]]
  $region73: #{tpu_custom_call.1} parent=0
    _
  %s9 = ssub.s32 1, %s7
  %s10 = scalar_select 0, %s9, %s7
  %s11 = sshll.u32 %s0, 4
  %s12 = int_to_ptr.vmem [resolvable:$true] %s11
  %14 = dma.vmem_to_smem %s12, 16, [#allocation5], [#allocation4]
  %15 = dma.done [#allocation4], 16
  %16 = sfence
  $region1: #{tpu_custom_call.1} parent=0
    #allocation6 [shape = 'u8[8192]{0}', space=vmem, size = 0x2000, scoped, tag = 'output window, operand 0, single buffered']
    #allocation7 [shape = 's32[1]{0}', space=sflag, size = 0x4, scoped, tag = 'scoped memory for tpu_custom_call.1']
    %17 = vsyncpa [#allocation7], 0
    // Predicated region
    $region2: #{tpu_custom_call.1} parent=1 // pred_check
      _
    $region3: #{tpu_custom_call.1} parent=1 // pred_check_branch
      %19 = sbr.rel (0) target = $region5
    $region4: #{tpu_custom_call.1} parent=1 // pred_region
      _
    $region5: #{tpu_custom_call.1} parent=1 // pred_fallthru
      _
    // Predicated region
    $region6: #{tpu_custom_call.1} parent=1 // pred_check
      _
    $region7: #{tpu_custom_call.1} parent=1 // pred_check_branch
      %21 = sbr.rel (0) target = $region9
    $region8: #{tpu_custom_call.1} parent=1 // pred_region
      _
    $region9: #{tpu_custom_call.1} parent=1 // pred_fallthru
      _
    // Predicated region
    $region10: #{tpu_custom_call.1} parent=1 // pred_check
      _
    $region11: #{tpu_custom_call.1} parent=1 // pred_check_branch
      %23 = sbr.rel (0) target = $region13
    $region12: #{tpu_custom_call.1} parent=1 // pred_region
      _
    $region13: #{tpu_custom_call.1} parent=1 // pred_fallthru
      _
    // Predicated region
    $region14: #{tpu_custom_call.1} parent=1 // pred_check
      _
    $region15: #{tpu_custom_call.1} parent=1 // pred_check_branch
      %25 = sbr.rel (0) target = $region17
    $region16: #{tpu_custom_call.1} parent=1 // pred_region
      _
    $region17: #{tpu_custom_call.1} parent=1 // pred_fallthru
      _
    %s26 = smul.u32 0, 16
    %s27 = sld [smem:[#allocation5 + %s26]]
    %s28 = smul.addr %s27, 16
    %s29 = scalar_lea.hbm %s2, %s28
    // Predicated region
    $region18: #{tpu_custom_call.1} parent=1 // pred_check
      _
    $region19: #{tpu_custom_call.1} parent=1 // pred_check_branch
      %31 = sbr.rel target = $region21
    $region20: #{tpu_custom_call.1} parent=1 // pred_region
      %32 = sst [smem:[#allocation10]] [#allocation9]
      %33 = sst [smem:[#allocation11]] [#allocation8]
    $region21: #{tpu_custom_call.1} parent=1 // pred_fallthru
      _
    %35 = shalt.err (0)
    %s37 = sshll.u32 [#allocation2], 4
    %s38 = int_to_ptr.vmem [resolvable:$true] %s37
    %40 = dma.hbm_to_vmem [thread:$0]  %s29, 16, %s38, [#allocation3]
    %s41 = sadd.s32 %s26, 1
    %s42 = sld [smem:[#allocation5 + %s41]]
    %s43 = smul.addr %s42, 16
    %s44 = scalar_lea.hbm %s2, %s43
    %s45 = scalar_lea.vmem [#allocation2], 1
    %s46 = scalar_lea.sflag [#allocation3], 1
    // Predicated region
    $region22: #{tpu_custom_call.1} parent=1 // pred_check
      _
    $region23: #{tpu_custom_call.1} parent=1 // pred_check_branch
      %48 = sbr.rel target = $region25
    $region24: #{tpu_custom_call.1} parent=1 // pred_region
      %49 = sst [smem:[#allocation10]] [#allocation13]
      %50 = sst [smem:[#allocation11]] [#allocation12]
    $region25: #{tpu_custom_call.1} parent=1 // pred_fallthru
      _
    %52 = shalt.err (0)
    %s54 = sshll.u32 %s45, 4
    %s55 = int_to_ptr.vmem [resolvable:$true] %s54
    %57 = dma.hbm_to_vmem [thread:$0]  %s44, 16, %s55, %s46
    %s58 = sadd.s32 %s26, 2
    %s59 = sld [smem:[#allocation5 + %s58]]
    %s60 = smul.addr %s59, 16
    %s61 = scalar_lea.hbm %s2, %s60
    %s62 = scalar_lea.vmem [#allocation2], 2
    %s63 = scalar_lea.sflag [#allocation3], 2
    // Predicated region
    $region26: #{tpu_custom_call.1} parent=1 // pred_check
      _
    $region27: #{tpu_custom_call.1} parent=1 // pred_check_branch
      %65 = sbr.rel target = $region29
    $region28: #{tpu_custom_call.1} parent=1 // pred_region
      %66 = sst [smem:[#allocation10]] [#allocation15]
      %67 = sst [smem:[#allocation11]] [#allocation14]
    $region29: #{tpu_custom_call.1} parent=1 // pred_fallthru
      _
    %69 = shalt.err (0)
    %s71 = sshll.u32 %s62, 4
    %s72 = int_to_ptr.vmem [resolvable:$true] %s71
    %74 = dma.hbm_to_vmem [thread:$0]  %s61, 16, %s72, %s63
    %s75 = sadd.s32 %s26, 3
    %s76 = sld [smem:[#allocation5 + %s75]]
    %s77 = smul.addr %s76, 16
    %s78 = scalar_lea.hbm %s2, %s77
    %s79 = scalar_lea.vmem [#allocation2], 3
    %s80 = scalar_lea.sflag [#allocation3], 3
    // Predicated region
    $region30: #{tpu_custom_call.1} parent=1 // pred_check
      _
    $region31: #{tpu_custom_call.1} parent=1 // pred_check_branch
      %82 = sbr.rel target = $region33
    $region32: #{tpu_custom_call.1} parent=1 // pred_region
      %83 = sst [smem:[#allocation10]] [#allocation17]
      %84 = sst [smem:[#allocation11]] [#allocation16]
    $region33: #{tpu_custom_call.1} parent=1 // pred_fallthru
      _
    %86 = shalt.err (0)
    %s88 = sshll.u32 %s79, 4
    %s89 = int_to_ptr.vmem [resolvable:$true] %s88
    %91 = dma.hbm_to_vmem [thread:$0]  %s78, 16, %s89, %s80
    %s92 = sadd.s32 %s26, 4
    %s93 = sld [smem:[#allocation5 + %s92]]
    %s94 = smul.addr %s93, 16
    %s95 = scalar_lea.hbm %s2, %s94
    %s96 = scalar_lea.vmem [#allocation2], 4
    %s97 = scalar_lea.sflag [#allocation3], 4
    // Predicated region
    $region34: #{tpu_custom_call.1} parent=1 // pred_check
      _
    $region35: #{tpu_custom_call.1} parent=1 // pred_check_branch
      %99 = sbr.rel target = $region37
    $region36: #{tpu_custom_call.1} parent=1 // pred_region
      %100 = sst [smem:[#allocation10]] [#allocation19]
      %101 = sst [smem:[#allocation11]] [#allocation18]
    $region37: #{tpu_custom_call.1} parent=1 // pred_fallthru
      _
    %103 = shalt.err (0)
    %s105 = sshll.u32 %s96, 4
    %s106 = int_to_ptr.vmem [resolvable:$true] %s105
    %108 = dma.hbm_to_vmem [thread:$0]  %s95, 16, %s106, %s97
    %s109 = sadd.s32 %s26, 5
    %s110 = sld [smem:[#allocation5 + %s109]]
    %s111 = smul.addr %s110, 16
    %s112 = scalar_lea.hbm %s2, %s111
    %s113 = scalar_lea.vmem [#allocation2], 5
    %s114 = scalar_lea.sflag [#allocation3], 5
    // Predicated region
    $region38: #{tpu_custom_call.1} parent=1 // pred_check
      _
    $region39: #{tpu_custom_call.1} parent=1 // pred_check_branch
      %116 = sbr.rel target = $region41
    $region40: #{tpu_custom_call.1} parent=1 // pred_region
      %117 = sst [smem:[#allocation10]] [#allocation21]
      %118 = sst [smem:[#allocation11]] [#allocation20]
    $region41: #{tpu_custom_call.1} parent=1 // pred_fallthru
      _
    %120 = shalt.err (0)
    %s122 = sshll.u32 %s113, 4
    %s123 = int_to_ptr.vmem [resolvable:$true] %s122
    %125 = dma.hbm_to_vmem [thread:$0]  %s112, 16, %s123, %s114
    %s126 = sadd.s32 %s26, 6
    %s127 = sld [smem:[#allocation5 + %s126]]
    %s128 = smul.addr %s127, 16
    %s129 = scalar_lea.hbm %s2, %s128
    %s130 = scalar_lea.vmem [#allocation2], 6
    %s131 = scalar_lea.sflag [#allocation3], 6
    // Predicated region
    $region42: #{tpu_custom_call.1} parent=1 // pred_check
      _
    $region43: #{tpu_custom_call.1} parent=1 // pred_check_branch
      %133 = sbr.rel target = $region45
    $region44: #{tpu_custom_call.1} parent=1 // pred_region
      %134 = sst [smem:[#allocation10]] [#allocation23]
      %135 = sst [smem:[#allocation11]] [#allocation22]
    $region45: #{tpu_custom_call.1} parent=1 // pred_fallthru
      _
    %137 = shalt.err (0)
    %s139 = sshll.u32 %s130, 4
    %s140 = int_to_ptr.vmem [resolvable:$true] %s139
    %142 = dma.hbm_to_vmem [thread:$0]  %s129, 16, %s140, %s131
    %s143 = sadd.s32 %s26, 7
    %s144 = sld [smem:[#allocation5 + %s143]]
    %s145 = smul.addr %s144, 16
    %s146 = scalar_lea.hbm %s2, %s145
    %s147 = scalar_lea.vmem [#allocation2], 7
    %s148 = scalar_lea.sflag [#allocation3], 7
    // Predicated region
    $region46: #{tpu_custom_call.1} parent=1 // pred_check
      _
    $region47: #{tpu_custom_call.1} parent=1 // pred_check_branch
      %150 = sbr.rel target = $region49
    $region48: #{tpu_custom_call.1} parent=1 // pred_region
      %151 = sst [smem:[#allocation10]] [#allocation25]
      %152 = sst [smem:[#allocation11]] [#allocation24]
    $region49: #{tpu_custom_call.1} parent=1 // pred_fallthru
      _
    %154 = shalt.err (0)
    %s156 = sshll.u32 %s147, 4
    %s157 = int_to_ptr.vmem [resolvable:$true] %s156
    %159 = dma.hbm_to_vmem [thread:$0]  %s146, 16, %s157, %s148
    loop: start=0, step=1, limit=16
    $region50: #{tpu_custom_call.1} parent=1 // loop_pre_header
      _
    $region51: #{tpu_custom_call.1} parent=1 // loop_header
      %s161 = sphi 0, %s165
      %p162 = scmp.ge.s32.totalorder %s161, 16
    $region52: #{tpu_custom_call.1} parent=1 // loop_header_branch
      %164 = sbr.rel (%p162) target = $region56
    $region53: #{tpu_custom_call.1} parent=1 // loop_body
      %p166 = scmp.lt.s32.totalorder %s161, 0
      %s167 = ssub.s32 0, %s161
      %s168 = scalar_select %p166, %s167, %s161
      %s169 = sand.u32 %s168, 7
      %s170 = ssub.s32 0, %s169
      %s171 = scalar_select %p166, %s170, %s169
      %p172 = scmp.ne.s32.totalorder %s171, 0
      %p173 = scmp.lt.s32.totalorder %s171, 0
      %p174 = pnand %p173, %p172
      %p175 = pneg %p174
      %s176 = sadd.s32 %s171, 8
      %s177 = scalar_select %p175, %s176, %s171
      %s178 = scalar_lea.sflag [#allocation3], %s177
      %s179 = smul.u32 1, 1
      %s180 = sshll.u32 %s179, 4
      %181 = dma.done %s178, %s180
      %s182 = sadd.s32 %s161, 8
      %p183 = scmp.lt.s32.totalorder %s182, 16
      // Predicated region
      $region57: #{tpu_custom_call.1} parent=53 // pred_check
        %p184 = pneg %p183
      $region58: #{tpu_custom_call.1} parent=53 // pred_check_branch
        %186 = sbr.rel (%p184) target = $region60
      $region59: #{tpu_custom_call.1} parent=53 // pred_region
        %s187 = sadd.s32 %s26, %s182
        %s188 = sld [smem:[#allocation5 + %s187]]
        %p189 = scmp.lt.s32.totalorder %s182, 0
        %s190 = ssub.s32 0, %s182
        %s191 = scalar_select %p189, %s190, %s182
        %s192 = sand.u32 %s191, 7
        %s193 = ssub.s32 0, %s192
        %s194 = scalar_select %p189, %s193, %s192
        %p195 = scmp.ne.s32.totalorder %s194, 0
        %p196 = scmp.lt.s32.totalorder %s194, 0
        %p197 = pnand %p196, %p195
        %p198 = pneg %p197
        %s199 = sadd.s32 %s194, 8
        %s200 = scalar_select %p198, %s199, %s194
        %s201 = smul.addr %s188, 16
        %s202 = scalar_lea.hbm %s2, %s201
        %s203 = scalar_lea.vmem [#allocation2], %s182
        %s204 = scalar_lea.sflag [#allocation3], %s200
        // Predicated region
        $region61: #{tpu_custom_call.1} parent=59 // pred_check
          _
        $region62: #{tpu_custom_call.1} parent=59 // pred_check_branch
          %206 = sbr.rel target = $region64
        $region63: #{tpu_custom_call.1} parent=59 // pred_region
          %207 = sst [smem:[#allocation10]] [#allocation27]
          %208 = sst [smem:[#allocation11]] [#allocation26]
        $region64: #{tpu_custom_call.1} parent=59 // pred_fallthru
          _
        %210 = shalt.err (0)
        %s212 = sshll.u32 %s203, 4
        %s213 = int_to_ptr.vmem [resolvable:$true] %s212
        %215 = dma.hbm_to_vmem [thread:$0]  %s202, 16, %s213, %s204
      $region60: #{tpu_custom_call.1} parent=53 // pred_fallthru
        _
    $region54: #{tpu_custom_call.1} parent=1 // loop_footer
      %s165 = sadd.s32 1, %s161
    $region55: #{tpu_custom_call.1} parent=1 // loop_footer_branch
      %160 = sbr.rel target = $region51
    $region56: #{tpu_custom_call.1} parent=1 // loop_exit
      _
    %v216 = vld [vmem:[%s1] sm:$0xff]
    %v217 = vld [vmem:[%s1 + $0x8] sm:$0xff]
    %v218 = vld [vmem:[%s4] sm:$0x1]
    %vm219 = vcmp.eq.s32.totalorder %v216, 1
    %vm220 = vcmp.eq.s32.totalorder %v217, 1
    %v221 = vld [vmem:[%s4 + $0x1] sm:$0x1]
    %v222 = vsel %vm219, 1, 0
    %v223 = vsel %vm220, 1, 0
    %224 = vset.pattern.permute.xlu0 0
    %225 = vperm.xlu0 %224, %v222
    %v226 = vpop.permute.xlu0 %225
    %227 = vset.pattern.permute.xlu0 0
    %228 = vperm.xlu0 %227, %v223
    %v229 = vpop.permute.xlu0 %228
    %vm230 = vcmp.eq.s32.totalorder %v226, 1
    %vm231 = vcmp.eq.s32.totalorder %v229, 1
    %v232 = vlaneseq
    %v233 = vshrl.u32 %v232, 7
    %v234 = vsub.s32 0, %v233
    %v235 = vrot.slane %v221, %v234
    %v236 = vlaneseq
    %v237 = vshrl.u32 %v236, 7
    %v238 = vsub.s32 0, %v237
    %v239 = vrot.slane %v218, %v238
    %v240 = vsel %vm230, %v235, %v239
    %v241 = vsel %vm231, %v235, %v239
    %v242 = vld [vmem:[#allocation2] sm:$0xff]
    %v243 = vld [vmem:[#allocation2 + $0x8] sm:$0xff]
    %v244 = vld [vmem:[%s3] sm:$0xff]
    %v245 = vld [vmem:[%s3 + $0x8] sm:$0xff]
    %v246 = vadd.f32 %v242, %v244
    %v247 = vadd.f32 %v243, %v245
    %v248 = vadd.f32 %v246, %v240
    %v249 = vadd.f32 %v247, %v241
    %250 = vadd.xlane.f32.xlu0 %v248
    %v251 = vpop.xlane.xlu0 %250
    %252 = vadd.xlane.f32.xlu0 %v249
    %v253 = vpop.xlane.xlu0 %252
    %v254 = vmul.f32 %v248, %v248
    %v255 = vmul.f32 %v249, %v249
    %256 = vadd.xlane.f32.xlu0 %v254
    %v257 = vpop.xlane.xlu0 %256
    %258 = vadd.xlane.f32.xlu0 %v255
    %v259 = vpop.xlane.xlu0 %258
    %v260 = vmul.f32 %v251, 0.03125
    %v261 = vmul.f32 %v253, 0.03125
    %v262 = vmul.f32 %v257, 0.03125
    %v263 = vmul.f32 %v259, 0.03125
    %v264 = vmul.f32 %v260, %v260
    %v265 = vmul.f32 %v261, %v261
    %v266 = vsub.f32 %v262, %v264
    %v267 = vsub.f32 %v263, %v265
    %v268 = vmax.f32 %v266, 0.0
    %v269 = vmax.f32 %v267, 0.0
    %v270 = vsub.f32 %v248, %v260
    %v271 = vsub.f32 %v249, %v261
    %v272 = vadd.f32 %v268, 1e-12
    %v273 = vadd.f32 %v269, 1e-12
    %v274 = vrsqrt.pop %v272
    %v275 = vrsqrt.pop %v273
    %v276 = vmul.f32 %v270, %v274
    %v277 = vmul.f32 %v271, %v275
    %v278 = vld [vmem:[%s5] sm:$0x1]
    %v279 = vlaneseq
    %v280 = vshrl.u32 %v279, 7
    %v281 = vsub.s32 0, %v280
    %v282 = vrot.slane %v278, %v281
    %v283 = vmul.f32 %v276, %v282
    %v284 = vmul.f32 %v277, %v282
    %v285 = vld [vmem:[%s5 + $0x1] sm:$0x1]
    %v286 = vlaneseq
    %v287 = vshrl.u32 %v286, 7
    %v288 = vsub.s32 0, %v287
    %v289 = vrot.slane %v285, %v288
    %v290 = vadd.f32 %v283, %v289
    %v291 = vadd.f32 %v284, %v289
    %292 = vst [vmem:[#allocation6] sm:$0xff] %v290
    %293 = vst [vmem:[#allocation6 + $0x8] sm:$0xff] %v291
    // Predicated region
    $region65: #{tpu_custom_call.1} parent=1 // pred_check
      _
    $region66: #{tpu_custom_call.1} parent=1 // pred_check_branch
      %295 = sbr.rel (0) target = $region68
    $region67: #{tpu_custom_call.1} parent=1 // pred_region
      %s297 = ssub.s32 256, 256
      %298 = vsyncadd [#allocation7], %s297
      %s299 = sshll.u32 [#allocation6], 4
      %s300 = int_to_ptr.vmem [resolvable:$true] %s299
      %305 = dma.vmem_to_hbm [thread:$0]  %s300, 256, %s6, [#allocation7], 128, 128, 8
    $region68: #{tpu_custom_call.1} parent=1 // pred_fallthru
      _
    // Predicated region
    $region69: #{tpu_custom_call.1} parent=1 // pred_check
      _
    $region70: #{tpu_custom_call.1} parent=1 // pred_check_branch
      %307 = sbr.rel (0) target = $region72
    $region71: #{tpu_custom_call.1} parent=1 // pred_region
      %308 = dma.done [#allocation7], 256
    $region72: #{tpu_custom_call.1} parent=1 // pred_fallthru
      _
    %309 = vsyncpa [#allocation7], 1
  %310 = vsyncmov [#allocation3]
  %s311 = vpop.sfrf %310
  %p312 = scmp.eq.s32.totalorder %s311, 0
  %p313 = pneg %p312
  %315 = shalt.err (%p313)
  %s316 = scalar_lea.sflag [#allocation3], 1
  %317 = vsyncmov %s316
  %s318 = vpop.sfrf %317
  %p319 = scmp.eq.s32.totalorder %s318, 0
  %p320 = pneg %p319
  %322 = shalt.err (%p320)
  %s323 = scalar_lea.sflag [#allocation3], 2
  %324 = vsyncmov %s323
  %s325 = vpop.sfrf %324
  %p326 = scmp.eq.s32.totalorder %s325, 0
  %p327 = pneg %p326
  %329 = shalt.err (%p327)
  %s330 = scalar_lea.sflag [#allocation3], 3
  %331 = vsyncmov %s330
  %s332 = vpop.sfrf %331
  %p333 = scmp.eq.s32.totalorder %s332, 0
  %p334 = pneg %p333
  %336 = shalt.err (%p334)
  %s337 = scalar_lea.sflag [#allocation3], 4
  %338 = vsyncmov %s337
  %s339 = vpop.sfrf %338
  %p340 = scmp.eq.s32.totalorder %s339, 0
  %p341 = pneg %p340
  %343 = shalt.err (%p341)
  %s344 = scalar_lea.sflag [#allocation3], 5
  %345 = vsyncmov %s344
  %s346 = vpop.sfrf %345
  %p347 = scmp.eq.s32.totalorder %s346, 0
  %p348 = pneg %p347
  %350 = shalt.err (%p348)
  %s351 = scalar_lea.sflag [#allocation3], 6
  %352 = vsyncmov %s351
  %s353 = vpop.sfrf %352
  %p354 = scmp.eq.s32.totalorder %s353, 0
  %p355 = pneg %p354
  %357 = shalt.err (%p355)
  %s358 = scalar_lea.sflag [#allocation3], 7
  %359 = vsyncmov %s358
  %s360 = vpop.sfrf %359
  %p361 = scmp.eq.s32.totalorder %s360, 0
  %p362 = pneg %p361
  %364 = shalt.err (%p362)

</llo_original>
